<compile_context>
chip_gen: v5e
topology: v5e:2x2
jax: 0.10.0
libtpu: 0.0.40
codegen_flags: <defaults>
</compile_context>

<pallas_src>
import functools

import jax
import jax.numpy as jnp
from jax.experimental import pallas as pl
from jax.experimental.pallas import tpu as pltpu


def _conv_taps(x, w, *, k, start, out_len):
    """out[:, c] = sum_t w[t] @ x[:, start + t + c]   (f32 accumulation on the MXU)."""
    acc = jnp.zeros((w.shape[1], out_len), jnp.float32)
    for t in range(k):                                   # static unroll, k is small
        acc = acc + jnp.dot(w[t], x[:, start + t:start + t + out_len],
                            preferred_element_type=jnp.float32)
    return acc


def _bn1_stats_kernel(x_ref, w1_ref, m2_ref, sum_ref, sq_ref, *, k, p_l, Wo):
    # x_ref: (Cin, Wi) chunk of NB concatenated halo-padded samples.
    h1 = _conv_taps(x_ref[...], w1_ref[...], k=k, start=p_l, out_len=Wo)   # pre-BN conv1 (valid cols)
    m = m2_ref[...]                                                        # (1, Wo) validity mask
    hm = h1 * m
    sum_ref[...] = jnp.sum(hm, axis=1, keepdims=True)
    sq_ref[...] = jnp.sum(h1 * hm, axis=1, keepdims=True)


def _bn2_stats_kernel(x_ref, w1_ref, w2_ref, s1_ref, t1_ref, m1_ref, m2_ref,
                      sum_ref, sq_ref, *, k, Wo, We1, cdtype):
    x = x_ref[...]
    h1e = _conv_taps(x, w1_ref[...], k=k, start=0, out_len=We1)            # conv1, extended domain
    a1e = jnp.maximum(h1e * s1_ref[...] + t1_ref[...], 0.0) * m1_ref[...]  # BN1+ReLU, zero 'same' pad
    h2 = _conv_taps(a1e.astype(cdtype), w2_ref[...], k=k, start=0, out_len=Wo)  # pre-BN conv2
    m2 = m2_ref[...]
    hm = h2 * m2
    sum_ref[...] = jnp.sum(hm, axis=1, keepdims=True)
    sq_ref[...] = jnp.sum(h2 * hm, axis=1, keepdims=True)


def _output_kernel(x_ref, w1_ref, w2_ref, wp_ref, s1_ref, t1_ref, s2_ref, t2_ref, m1_ref,
                   o_ref, *, k, p_l, Wo, We1, cdtype):
    x = x_ref[...]
    h1e = _conv_taps(x, w1_ref[...], k=k, start=0, out_len=We1)
    a1e = jnp.maximum(h1e * s1_ref[...] + t1_ref[...], 0.0) * m1_ref[...]
    h2 = _conv_taps(a1e.astype(cdtype), w2_ref[...], k=k, start=0, out_len=Wo)
    z = h2 * s2_ref[...] + t2_ref[...]                                     # BN2 folded scale/shift
    proj = jnp.dot(wp_ref[...], x[:, 2 * p_l:2 * p_l + Wo],
                   preferred_element_type=jnp.float32)                     # 1x1 projection skip
    o_ref[...] = jnp.maximum(z + proj, 0.0).astype(o_ref.dtype)


def resnet_block_pallas(x_ncl, params, k_size, eps=1e-5, compute_dtype=jnp.float32,
                        samples_per_chunk=None):
    """x_ncl: (N, C_in, L) as in PyTorch. Returns (N, C_out, L)."""
    w1, g1, b1, w2, g2, b2, wp = params                   # PyTorch weight layouts
    N, Cin, L = x_ncl.shape
    Cout = w1.shape[0]
    k = k_size
    p_l = (k - 1) // 2
    p_r = (k - 1) - p_l
    Wp = L + 2 * (k - 1)                                  # per-sample double-halo strip width

    # ---- batch chunking: NB samples per grid step, concatenated along the lane axis ----------
    if samples_per_chunk is None:
        NB = max(1, min(N, max(1, 4096 // Wp)))           # ~4K lanes per chunk (lane-dense)
    else:
        NB = max(1, min(N, samples_per_chunk))
    NC = -(-N // NB)                                      # number of chunks (grid size)
    Npad = NC * NB
    Wo = ((NB * Wp + 127) // 128) * 128                   # working width; 128-mult -> unmasked vst
    We1 = Wo + (k - 1)                                    # extended conv1 output width
    Wi = Wo + 2 * (k - 1)                                 # chunk input width

    # ---- glue (plain JAX): halo pad, concatenate samples along lanes, validity masks ---------
    x_c = x_ncl.astype(compute_dtype)
    xpad = jnp.pad(x_c, ((0, Npad - N), (0, 0), (2 * p_l, 2 * p_r)))       # (Npad, Cin, Wp)
    xflat = xpad.reshape(NC, NB, Cin, Wp).transpose(0, 2, 1, 3).reshape(NC, Cin, NB * Wp)
    xflat = jnp.pad(xflat, ((0, 0), (0, 0), (0, Wi - NB * Wp)))            # (NC, Cin, Wi)

    samp = jnp.arange(Npad).reshape(NC, NB)
    real = samp < N                                                        # mask out batch padding
    col = jnp.arange(Wp)
    v1 = (col >= p_l) & (col < p_l + L)                   # valid h1 columns (extended layout)
    v2 = col < L                                          # valid h2 / output columns
    m1 = (real[:, :, None] & v1[None, None, :]).astype(jnp.float32).reshape(NC, NB * Wp)
    m1 = jnp.pad(m1, ((0, 0), (0, We1 - NB * Wp)))[:, None, :]             # (NC, 1, We1)
    m2 = (real[:, :, None] & v2[None, None, :]).astype(jnp.float32).reshape(NC, NB * Wp)
    m2 = jnp.pad(m2, ((0, 0), (0, Wo - NB * Wp)))[:, None, :]              # (NC, 1, Wo)

    w1_t = jnp.transpose(w1, (2, 0, 1)).astype(compute_dtype)              # (k, Cout, Cin)
    w2_t = jnp.transpose(w2, (2, 0, 1)).astype(compute_dtype)              # (k, Cout, Cout)
    wp_m = wp[:, :, 0].astype(compute_dtype)                               # (Cout, Cin)

    grid = (NC,)
    cparams = pltpu.CompilerParams(
        dimension_semantics=("parallel",),                # chunk axis shards across TensorCores
        vmem_limit_bytes=32 * 1024 * 1024,                # safe on every generation
    )

    def chunk_spec(trailing):
        # block (1, d1, d2) with leading chunk dim squeezed inside the kernel
        return pl.BlockSpec((None,) + tuple(trailing), lambda i: (i, 0, 0))

    def rep_spec(shape):
        return pl.BlockSpec(tuple(shape), lambda i: (0,) * len(shape))

    stat_shape = jax.ShapeDtypeStruct((NC, Cout, 1), jnp.float32)

    def finalize(sum_nc1, sq_nc1, gamma, beta):
        # One-pass BN statistics: var = E[h^2] - mean^2, clamped >= 0 (f32 cancellation guard).
        cnt = jnp.float32(N * L)
        s = jnp.sum(sum_nc1[:, :, 0], axis=0)
        ss = jnp.sum(sq_nc1[:, :, 0], axis=0)
        mean = s / cnt
        var = jnp.maximum(ss / cnt - mean * mean, 0.0)
        inv = jax.lax.rsqrt(var + eps)
        scale = gamma.astype(jnp.float32) * inv
        shift = beta.astype(jnp.float32) - mean * scale
        return scale.reshape(Cout, 1), shift.reshape(Cout, 1)

    # ---- Pass A: BN1 partial statistics (per chunk) -------------------------------------------
    sum1, sq1 = pl.pallas_call(
        functools.partial(_bn1_stats_kernel, k=k, p_l=p_l, Wo=Wo),
        grid=grid,
        in_specs=[chunk_spec((Cin, Wi)), rep_spec(w1_t.shape), chunk_spec((1, Wo))],
        out_specs=[chunk_spec((Cout, 1)), chunk_spec((Cout, 1))],
        out_shape=[stat_shape, stat_shape],
        compiler_params=cparams,
    )(xflat, w1_t, m2)
    scale1, shift1 = finalize(sum1, sq1, g1, b1)

    # ---- Pass B: BN2 partial statistics (per chunk) -------------------------------------------
    sum2, sq2 = pl.pallas_call(
        functools.partial(_bn2_stats_kernel, k=k, Wo=Wo, We1=We1, cdtype=compute_dtype),
        grid=grid,
        in_specs=[chunk_spec((Cin, Wi)), rep_spec(w1_t.shape), rep_spec(w2_t.shape),
                  rep_spec((Cout, 1)), rep_spec((Cout, 1)),
                  chunk_spec((1, We1)), chunk_spec((1, Wo))],
        out_specs=[chunk_spec((Cout, 1)), chunk_spec((Cout, 1))],
        out_shape=[stat_shape, stat_shape],
        compiler_params=cparams,
    )(xflat, w1_t, w2_t, scale1, shift1, m1, m2)
    scale2, shift2 = finalize(sum2, sq2, g2, b2)

    # ---- Pass C: full chain + projection + residual + ReLU ------------------------------------
    out_flat = pl.pallas_call(
        functools.partial(_output_kernel, k=k, p_l=p_l, Wo=Wo, We1=We1, cdtype=compute_dtype),
        grid=grid,
        in_specs=[chunk_spec((Cin, Wi)), rep_spec(w1_t.shape), rep_spec(w2_t.shape),
                  rep_spec(wp_m.shape),
                  rep_spec((Cout, 1)), rep_spec((Cout, 1)),
                  rep_spec((Cout, 1)), rep_spec((Cout, 1)),
                  chunk_spec((1, We1))],
        out_specs=chunk_spec((Cout, Wo)),
        out_shape=jax.ShapeDtypeStruct((NC, Cout, Wo), jnp.float32),
        compiler_params=cparams,
    )(xflat, w1_t, w2_t, wp_m, scale1, shift1, scale2, shift2, m1)

    # Extract valid columns back into PyTorch layout (N, Cout, L).
    out = out_flat[:, :, :NB * Wp].reshape(NC, Cout, NB, Wp)
    out = out.transpose(0, 2, 1, 3).reshape(Npad, Cout, Wp)[:N, :, :L]
    return out


def resnet_block_ref(x_ncl, params, k_size, eps=1e-5):
    """Pure-JAX reference mirroring the PyTorch forward (train-mode BN, ReLU act)."""
    w1, g1, b1, w2, g2, b2, wp = params

    def conv1d_same(x, w):
        kk = w.shape[2]
        pl_, pr_ = (kk - 1) // 2, (kk - 1) - (kk - 1) // 2
        return jax.lax.conv_general_dilated(
            x.astype(jnp.float32), w.astype(jnp.float32), window_strides=(1,),
            padding=[(pl_, pr_)], dimension_numbers=('NCH', 'OIH', 'NCH'),
            precision=jax.lax.Precision.HIGHEST)

    def bn(h, g, b):
        mean = jnp.mean(h, axis=(0, 2), keepdims=True)
        var = jnp.mean((h - mean) ** 2, axis=(0, 2), keepdims=True)
        return (h - mean) * jax.lax.rsqrt(var + eps) * g[None, :, None] + b[None, :, None]

    h = conv1d_same(x_ncl, w1)
    h = jnp.maximum(bn(h, g1, b1), 0.0)
    h = conv1d_same(h, w2)
    h = bn(h, g2, b2)
    p = conv1d_same(x_ncl, wp)
    return jnp.maximum(h + p, 0.0)


if __name__ == "__main__":
    Cin, L = 4, 16
    Cout, K = 8, 3

    key = jax.random.PRNGKey(0)
    kx, kx2, k1, k2, kp, kg1, kb1, kg2, kb2 = jax.random.split(key, 9)

    # Deterministic synthetic parameters (PyTorch weight layouts: (C_out, C_in, k)).
    w1 = 0.2 * jax.random.normal(k1, (Cout, Cin, K), jnp.float32)
    w2 = 0.2 * jax.random.normal(k2, (Cout, Cout, K), jnp.float32)
    wp = 0.2 * jax.random.normal(kp, (Cout, Cin, 1), jnp.float32)
    g1 = 1.0 + 0.1 * jax.random.normal(kg1, (Cout,), jnp.float32)
    b1 = 0.1 * jax.random.normal(kb1, (Cout,), jnp.float32)
    g2 = 1.0 + 0.1 * jax.random.normal(kg2, (Cout,), jnp.float32)
    b2 = 0.1 * jax.random.normal(kb2, (Cout,), jnp.float32)
    params = (w1, g1, b1, w2, g2, b2, wp)

    # Case 1: single chunk (whole batch in one grid step).
    N = 2
    x = jax.random.normal(kx, (N, Cin, L), jnp.float32)
    out = jax.block_until_ready(resnet_block_pallas(x, params, K))
    ref = jax.block_until_ready(resnet_block_ref(x, params, K))
    assert out.shape == (N, Cout, L)
    err = float(jnp.max(jnp.abs(out - ref)))
    assert jnp.allclose(out, ref, atol=1e-4, rtol=1e-4), f"case1 max abs err = {err}"

    # Case 2: multiple chunks + batch padding (N=3, 2 samples per chunk -> 1 padded sample).
    N2 = 3
    x2 = jax.random.normal(kx2, (N2, Cin, L), jnp.float32)
    out2 = jax.block_until_ready(resnet_block_pallas(x2, params, K, samples_per_chunk=2))
    ref2 = jax.block_until_ready(resnet_block_ref(x2, params, K))
    assert out2.shape == (N2, Cout, L)
    err2 = float(jnp.max(jnp.abs(out2 - ref2)))
    assert jnp.allclose(out2, ref2, atol=1e-4, rtol=1e-4), f"case2 max abs err = {err2}"

    print("KERNEL_OK")
</pallas_src>

<mosaic_0001>
module attributes {stable_mosaic.version = 11 : i64} {
  func.func @_bn1_stats_kernel(%arg0: i32, %arg1: memref<1x4x132xf32, #tpu.memory_space<vmem>>, %arg2: memref<3x8x4xf32, #tpu.memory_space<vmem>>, %arg3: memref<1x1x128xf32, #tpu.memory_space<vmem>>, %arg4: memref<1x8x1xf32, #tpu.memory_space<vmem>>, %arg5: memref<1x8x1xf32, #tpu.memory_space<vmem>>) attributes {dimension_semantics = [#tpu.dimension_semantics<parallel>], iteration_bounds = array<i64: 1>, scalar_prefetch = 0 : i64, scratch_operands = 0 : i64, tpu.core_type = #tpu.core_type<tc>, window_params = [{transform_indices = @transform_0, window_bounds = array<i64: 1, 4, 132>}, {pipeline_mode = #tpu.pipeline_mode<synchronous>, transform_indices = @transform_1, window_bounds = array<i64: 3, 8, 4>}, {transform_indices = @transform_2, window_bounds = array<i64: 1, 1, 128>}, {transform_indices = @transform_3, window_bounds = array<i64: 1, 8, 1>}, {transform_indices = @transform_4, window_bounds = array<i64: 1, 8, 1>}]} {
    %c0 = arith.constant 0 : index
    %c0_0 = arith.constant 0 : index
    %c0_1 = arith.constant 0 : index
    %0 = vector.load %arg1[%c0, %c0_0, %c0_1] : memref<1x4x132xf32, #tpu.memory_space<vmem>>, vector<1x4x132xf32>
    %1 = vector.shape_cast %0 : vector<1x4x132xf32> to vector<4x132xf32>
    %c0_2 = arith.constant 0 : index
    %c0_3 = arith.constant 0 : index
    %c0_4 = arith.constant 0 : index
    %2 = vector.load %arg2[%c0_2, %c0_3, %c0_4] : memref<3x8x4xf32, #tpu.memory_space<vmem>>, vector<3x8x4xf32>
    %cst = arith.constant 0.000000e+00 : f32
    %3 = vector.broadcast %cst : f32 to vector<8x128xf32>
    %4 = vector.extract_strided_slice %2 {offsets = [0, 0, 0], sizes = [1, 8, 4], strides = [1, 1, 1]} : vector<3x8x4xf32> to vector<1x8x4xf32>
    %5 = vector.shape_cast %4 : vector<1x8x4xf32> to vector<8x4xf32>
    %6 = vector.extract_strided_slice %1 {offsets = [0, 1], sizes = [4, 128], strides = [1, 1]} : vector<4x132xf32> to vector<4x128xf32>
    %cst_5 = arith.constant dense<0.000000e+00> : vector<8x128xf32>
    %7 = tpu.matmul %5, %6, %cst_5 {dimension_numbers = #tpu.dot_dimension_numbers<[1], [0], [0], [1], [0, 0, 1, 1], [], []>} : vector<8x4xf32>, vector<4x128xf32>, vector<8x128xf32> -> vector<8x128xf32>
    %8 = arith.addf %3, %7 : vector<8x128xf32>
    %9 = vector.extract_strided_slice %2 {offsets = [1, 0, 0], sizes = [1, 8, 4], strides = [1, 1, 1]} : vector<3x8x4xf32> to vector<1x8x4xf32>
    %10 = vector.shape_cast %9 : vector<1x8x4xf32> to vector<8x4xf32>
    %11 = vector.extract_strided_slice %1 {offsets = [0, 2], sizes = [4, 128], strides = [1, 1]} : vector<4x132xf32> to vector<4x128xf32>
    %cst_6 = arith.constant dense<0.000000e+00> : vector<8x128xf32>
    %12 = tpu.matmul %10, %11, %cst_6 {dimension_numbers = #tpu.dot_dimension_numbers<[1], [0], [0], [1], [0, 0, 1, 1], [], []>} : vector<8x4xf32>, vector<4x128xf32>, vector<8x128xf32> -> vector<8x128xf32>
    %13 = arith.addf %8, %12 : vector<8x128xf32>
    %14 = vector.extract_strided_slice %2 {offsets = [2, 0, 0], sizes = [1, 8, 4], strides = [1, 1, 1]} : vector<3x8x4xf32> to vector<1x8x4xf32>
    %15 = vector.shape_cast %14 : vector<1x8x4xf32> to vector<8x4xf32>
    %16 = vector.extract_strided_slice %1 {offsets = [0, 3], sizes = [4, 128], strides = [1, 1]} : vector<4x132xf32> to vector<4x128xf32>
    %cst_7 = arith.constant dense<0.000000e+00> : vector<8x128xf32>
    %17 = tpu.matmul %15, %16, %cst_7 {dimension_numbers = #tpu.dot_dimension_numbers<[1], [0], [0], [1], [0, 0, 1, 1], [], []>} : vector<8x4xf32>, vector<4x128xf32>, vector<8x128xf32> -> vector<8x128xf32>
    %18 = arith.addf %13, %17 : vector<8x128xf32>
    %c0_8 = arith.constant 0 : index
    %c0_9 = arith.constant 0 : index
    %c0_10 = arith.constant 0 : index
    %19 = vector.load %arg3[%c0_8, %c0_9, %c0_10] : memref<1x1x128xf32, #tpu.memory_space<vmem>>, vector<1x1x128xf32>
    %20 = vector.shape_cast %19 : vector<1x1x128xf32> to vector<1x128xf32>
    %21 = vector.broadcast %20 : vector<1x128xf32> to vector<8x128xf32>
    %22 = arith.mulf %18, %21 : vector<8x128xf32>
    %cst_11 = arith.constant dense<0.000000e+00> : vector<8xf32>
    %23 = vector.multi_reduction <add>, %22, %cst_11 [1] : vector<8x128xf32> to vector<8xf32>
    %24 = vector.shape_cast %23 : vector<8xf32> to vector<8x1xf32>
    %c0_12 = arith.constant 0 : index
    %c0_13 = arith.constant 0 : index
    %c0_14 = arith.constant 0 : index
    %25 = vector.load %arg4[%c0_12, %c0_13, %c0_14] : memref<1x8x1xf32, #tpu.memory_space<vmem>>, vector<1x8x1xf32>
    %26 = vector.shape_cast %25 : vector<1x8x1xf32> to vector<8x1xf32>
    %27 = vector.shape_cast %24 : vector<8x1xf32> to vector<1x8x1xf32>
    tpu.vector_store %arg4[%c0_12, %c0_13, %c0_14], %27 {strides = array<i32>} : memref<1x8x1xf32, #tpu.memory_space<vmem>>, vector<1x8x1xf32>,
    %28 = arith.mulf %18, %22 : vector<8x128xf32>
    %cst_15 = arith.constant dense<0.000000e+00> : vector<8xf32>
    %29 = vector.multi_reduction <add>, %28, %cst_15 [1] : vector<8x128xf32> to vector<8xf32>
    %30 = vector.shape_cast %29 : vector<8xf32> to vector<8x1xf32>
    %c0_16 = arith.constant 0 : index
    %c0_17 = arith.constant 0 : index
    %c0_18 = arith.constant 0 : index
    %31 = vector.load %arg5[%c0_16, %c0_17, %c0_18] : memref<1x8x1xf32, #tpu.memory_space<vmem>>, vector<1x8x1xf32>
    %32 = vector.shape_cast %31 : vector<1x8x1xf32> to vector<8x1xf32>
    %33 = vector.shape_cast %30 : vector<8x1xf32> to vector<1x8x1xf32>
    tpu.vector_store %arg5[%c0_16, %c0_17, %c0_18], %33 {strides = array<i32>} : memref<1x8x1xf32, #tpu.memory_space<vmem>>, vector<1x8x1xf32>,
    return
  }
  func.func @transform_0(%arg0: i32) -> (i32, i32, i32) {
    %c0_i32 = arith.constant 0 : i32
    %c0_i32_0 = arith.constant 0 : i32
    %c0_i32_1 = arith.constant 0 : i32
    return %arg0, %c0_i32, %c0_i32_0 : i32, i32, i32
  }
  func.func @transform_1(%arg0: i32) -> (i32, i32, i32) {
    %c0_i32 = arith.constant 0 : i32
    %c0_i32_0 = arith.constant 0 : i32
    %c0_i32_1 = arith.constant 0 : i32
    %c0_i32_2 = arith.constant 0 : i32
    return %c0_i32, %c0_i32_0, %c0_i32_1 : i32, i32, i32
  }
  func.func @transform_2(%arg0: i32) -> (i32, i32, i32) {
    %c0_i32 = arith.constant 0 : i32
    %c0_i32_0 = arith.constant 0 : i32
    %c0_i32_1 = arith.constant 0 : i32
    return %arg0, %c0_i32, %c0_i32_0 : i32, i32, i32
  }
  func.func @transform_3(%arg0: i32) -> (i32, i32, i32) {
    %c0_i32 = arith.constant 0 : i32
    %c0_i32_0 = arith.constant 0 : i32
    %c0_i32_1 = arith.constant 0 : i32
    return %arg0, %c0_i32, %c0_i32_0 : i32, i32, i32
  }
  func.func @transform_4(%arg0: i32) -> (i32, i32, i32) {
    %c0_i32 = arith.constant 0 : i32
    %c0_i32_0 = arith.constant 0 : i32
    %c0_i32_1 = arith.constant 0 : i32
    return %arg0, %c0_i32, %c0_i32_0 : i32, i32, i32
  }
}

</mosaic_0001>

<llo_original>
// kernel: tpu_custom_call.1
$region0: #{tpu_custom_call.1}
  #allocation0 [shape = 'u32[]', space=smem, size = 0x4, offset = 0x4, fixed_abs, tag = 'smem constant byte address 0x4 - core index']
  #allocation1 [shape = 'u32[72,128]{1,0:T(1,128)}', space=vmem, size = 0x9000, scoped, tag = 'internal scratch']
  %s0 = inlined_call_operand.vmem [shape: f32[1,4,132], index: 0, kind: input, shape index: {}]
  %s1 = inlined_call_operand.vmem [shape: f32[3,8,4], index: 1, kind: input, shape index: {}]
  %s2 = inlined_call_operand.vmem [shape: f32[1,1,128], index: 2, kind: input, shape index: {}]
  %s3 = inlined_call_operand.vmem [shape: f32[1,8,1], index: 3, kind: output, shape index: {0}]
  %s4 = inlined_call_operand.vmem [shape: f32[1,8,1], index: 4, kind: output, shape index: {1}]
  %5 = xla_tuple %s3, %s4
  %s6 = sld [smem:[#allocation0]]
  $region30: #{tpu_custom_call.1} parent=0
    _
  %s8 = ssub.s32 1, %s6
  %s9 = scalar_select 0, %s8, %s6
  // Predicated region
  $region2: #{tpu_custom_call.1} parent=0 // pred_check
    _
  $region3: #{tpu_custom_call.1} parent=0 // pred_check_branch
    %11 = sbr.rel (0) target = $region5
  $region4: #{tpu_custom_call.1} parent=0 // pred_region
    _
  $region5: #{tpu_custom_call.1} parent=0 // pred_fallthru
    _
  // Predicated region
  $region6: #{tpu_custom_call.1} parent=0 // pred_check
    _
  $region7: #{tpu_custom_call.1} parent=0 // pred_check_branch
    %13 = sbr.rel (0) target = $region9
  $region8: #{tpu_custom_call.1} parent=0 // pred_region
    _
  $region9: #{tpu_custom_call.1} parent=0 // pred_fallthru
    _
  // Predicated region
  $region10: #{tpu_custom_call.1} parent=0 // pred_check
    _
  $region11: #{tpu_custom_call.1} parent=0 // pred_check_branch
    %15 = sbr.rel (0) target = $region13
  $region12: #{tpu_custom_call.1} parent=0 // pred_region
    _
  $region13: #{tpu_custom_call.1} parent=0 // pred_fallthru
    _
  %v16 = vld [vmem:[%s0] sm:$0xff]
  %v17 = vld [vmem:[%s1] sm:$0xff]
  %v18 = vld [vmem:[%s1 + $0x8] sm:$0xff]
  %v19 = vld [vmem:[%s1 + $0x10] sm:$0xff]
  %21 = vst [vmem:[#allocation1] ss:$2 sm:$0xff] %v16
  %v22 = vld.sshfl [vmem:[#allocation1] sm:$0xff pattern:$0x75316420]
  %v23 = vld.sshfl [vmem:[#allocation1 + $0x8] sm:$0xff pattern:$0x75316420]
  %24 = vrot.lane.b32.xlu0 %v22, 126
  %v25 = vpop.permute.xlu0 %24
  %26 = vrot.lane.b32.xlu0 %v23, 126
  %v27 = vpop.permute.xlu0 %26
  %vm28 = vcmask 1031168
  %v29 = vsel %vm28, %v25, %v27
  %vm30 = vcmask 31744
  %v32 = vsel %vm30, %v18, 0
  %vm34 = vcmask 1043456
  %v35 = vsel %vm34, %v29, 0
  %37 = vmatpush.msra.mxu0 0.0
  %38 = vmatpush.msra.mxu0 0.0
  %39 = vmatpush.msra.mxu0 0.0
  %40 = vmatpush.msra.mxu0 0.0
  %41 = vmatpush.msra.mxu0 0.0
  %42 = vmatpush.msra.mxu0 0.0
  %43 = vmatpush.msra.mxu0 0.0
  %44 = vmatpush.msra.mxu0 0.0
  %45 = vmatpush.msra.mxu0 0.0
  %46 = vmatpush.msra.mxu0 0.0
  %47 = vmatpush.msra.mxu0 0.0
  %48 = vmatpush.msra.mxu0 0.0
  %49 = vmatpush.msra.mxu0 0.0
  %50 = vmatpush.msra.mxu0 0.0
  %51 = vmatpush.msra.mxu0 0.0
  %52 = vmatpush.msra.mxu0 %v35
  %53 = vmatmul.f32.gmra.mxu0 %v32
  %v54 = vpop.f32.mrf.mxu0
  %v55 = vadd.f32 0.0, %v54
  %56 = vdwg.mxu0
  %57 = vst [vmem:[#allocation1] ss:$2 sm:$0xff] %v16
  %v58 = vld.sshfl [vmem:[#allocation1] sm:$0xff pattern:$0x75316420]
  %v59 = vld.sshfl [vmem:[#allocation1 + $0x8] sm:$0xff pattern:$0x75316420]
  %60 = vrot.lane.b32.xlu0 %v58, 127
  %v61 = vpop.permute.xlu0 %60
  %62 = vrot.lane.b32.xlu0 %v59, 127
  %v63 = vpop.permute.xlu0 %62
  %vm64 = vcmask 1039360
  %v65 = vsel %vm64, %v61, %v63
  %v67 = vsel %vm30, %v17, 0
  %v69 = vsel %vm34, %v65, 0
  %71 = vmatpush.msra.mxu0 0.0
  %72 = vmatpush.msra.mxu0 0.0
  %73 = vmatpush.msra.mxu0 0.0
  %74 = vmatpush.msra.mxu0 0.0
  %75 = vmatpush.msra.mxu0 0.0
  %76 = vmatpush.msra.mxu0 0.0
  %77 = vmatpush.msra.mxu0 0.0
  %78 = vmatpush.msra.mxu0 0.0
  %79 = vmatpush.msra.mxu0 0.0
  %80 = vmatpush.msra.mxu0 0.0
  %81 = vmatpush.msra.mxu0 0.0
  %82 = vmatpush.msra.mxu0 0.0
  %83 = vmatpush.msra.mxu0 0.0
  %84 = vmatpush.msra.mxu0 0.0
  %85 = vmatpush.msra.mxu0 0.0
  %86 = vmatpush.msra.mxu0 %v69
  %87 = vmatmul.f32.gmra.mxu0 %v67
  %v88 = vpop.f32.mrf.mxu0
  %v89 = vadd.f32 %v55, %v88
  %90 = vdwg.mxu0
  %91 = vst [vmem:[#allocation1] ss:$2 sm:$0xff] %v16
  %v92 = vld.sshfl [vmem:[#allocation1] sm:$0xff pattern:$0x75316420]
  %v93 = vld.sshfl [vmem:[#allocation1 + $0x8] sm:$0xff pattern:$0x75316420]
  %94 = vrot.lane.b32.xlu0 %v92, 125
  %v95 = vpop.permute.xlu0 %94
  %96 = vrot.lane.b32.xlu0 %v93, 125
  %v97 = vpop.permute.xlu0 %96
  %vm98 = vcmask 1022976
  %v99 = vsel %vm98, %v95, %v97
  %v101 = vsel %vm30, %v19, 0
  %v103 = vsel %vm34, %v99, 0
  %105 = vmatpush.msra.mxu0 0.0
  %106 = vmatpush.msra.mxu0 0.0
  %107 = vmatpush.msra.mxu0 0.0
  %108 = vmatpush.msra.mxu0 0.0
  %109 = vmatpush.msra.mxu0 0.0
  %110 = vmatpush.msra.mxu0 0.0
  %111 = vmatpush.msra.mxu0 0.0
  %112 = vmatpush.msra.mxu0 0.0
  %113 = vmatpush.msra.mxu0 0.0
  %114 = vmatpush.msra.mxu0 0.0
  %115 = vmatpush.msra.mxu0 0.0
  %116 = vmatpush.msra.mxu0 0.0
  %117 = vmatpush.msra.mxu0 0.0
  %118 = vmatpush.msra.mxu0 0.0
  %119 = vmatpush.msra.mxu0 0.0
  %120 = vmatpush.msra.mxu0 %v103
  %121 = vmatmul.f32.gmra.mxu0 %v101
  %v122 = vpop.f32.mrf.mxu0
  %v123 = vadd.f32 0.0, %v122
  %124 = vdwg.mxu0
  %v125 = vadd.f32 %v89, %v123
  %v126 = vld [vmem:[%s2] sm:$0x1]
  %v128 = vperm.slane %v126, 0
  %v130 = vmul.f32 %v125, %v128
  %131 = vadd.xlane.f32.xlu0 %v130
  %v132 = vpop.xlane.xlu0 %131
  %vm133 = vcmask 7168
  %134 = vst.msk [vmem:[%s3] sm:$0xff] %vm133, %v132
  %v135 = vmul.f32 %v125, %v130
  %136 = vadd.xlane.f32.xlu0 %v135
  %v137 = vpop.xlane.xlu0 %136
  %138 = vst.msk [vmem:[%s4] sm:$0xff] %vm133, %v137
  // Predicated region
  $region14: #{tpu_custom_call.1} parent=0 // pred_check
    _
  $region15: #{tpu_custom_call.1} parent=0 // pred_check_branch
    %140 = sbr.rel (0) target = $region17
  $region16: #{tpu_custom_call.1} parent=0 // pred_region
    _
  $region17: #{tpu_custom_call.1} parent=0 // pred_fallthru
    _
  // Predicated region
  $region18: #{tpu_custom_call.1} parent=0 // pred_check
    _
  $region19: #{tpu_custom_call.1} parent=0 // pred_check_branch
    %142 = sbr.rel (0) target = $region21
  $region20: #{tpu_custom_call.1} parent=0 // pred_region
    _
  $region21: #{tpu_custom_call.1} parent=0 // pred_fallthru
    _
  // Predicated region
  $region22: #{tpu_custom_call.1} parent=0 // pred_check
    _
  $region23: #{tpu_custom_call.1} parent=0 // pred_check_branch
    %144 = sbr.rel (0) target = $region25
  $region24: #{tpu_custom_call.1} parent=0 // pred_region
    _
  $region25: #{tpu_custom_call.1} parent=0 // pred_fallthru
    _
  // Predicated region
  $region26: #{tpu_custom_call.1} parent=0 // pred_check
    _
  $region27: #{tpu_custom_call.1} parent=0 // pred_check_branch
    %146 = sbr.rel (0) target = $region29
  $region28: #{tpu_custom_call.1} parent=0 // pred_region
    _
  $region29: #{tpu_custom_call.1} parent=0 // pred_fallthru
    _

</llo_original>
